<compile_context>
chip_gen: v7x
topology: tpu7x:2x2x1
jax: 0.10.0
libtpu: 0.0.40
codegen_flags: <defaults>
</compile_context>

<pallas_src>
import functools

import jax
import jax.numpy as jnp
from jax.experimental import pallas as pl
from jax.experimental.pallas import tpu as pltpu


def _round_up(x, m):
    return ((x + m - 1) // m) * m


# ---------------------------------------------------------------------------
# Pallas kernel: fused (embedding lookup + fc1 -> ReLU -> fc2 -> ReLU -> fc3)
# ---------------------------------------------------------------------------
def _mlp_kernel(num_ref, cat_ref, tcat_ref, w1n_ref, w2_ref, b2_ref,
                w3_ref, b3_ref, o_ref, *, offsets, nc_total, out_dim,
                compute_dtype):
    cdt = compute_dtype
    bb = num_ref.shape[0]

    # All embedding gathers fused as ONE multi-hot matmul against the
    # row-concatenated folded tables (E_i @ W1_i, b1 folded into table 0).
    # Per-table lane ranges are disjoint, so OR-ing per-column one-hots gives
    # the multi-hot; built directly in the compute dtype.
    cat = cat_ref[...]                                        # (bb, n_cat) i32
    classes = jax.lax.broadcasted_iota(jnp.int32, (bb, nc_total), 1)
    hit = (cat[:, 0:1] + offsets[0]) == classes
    for i in range(1, len(offsets)):
        hit = jnp.logical_or(hit, (cat[:, i:i + 1] + offsets[i]) == classes)
    multihot = hit.astype(cdt)                                # (bb, nc_total)

    # fc1 = numeric part + fused categorical part, f32 accumulation.
    h1 = jnp.dot(num_ref[...].astype(cdt), w1n_ref[...],
                 preferred_element_type=jnp.float32)
    h1 = h1 + jnp.dot(multihot, tcat_ref[...],
                      preferred_element_type=jnp.float32)
    h1 = jnp.maximum(h1, 0.0).astype(cdt)       # ReLU(fc1); b1 already folded
    # dropout(p=0.2) is identity at inference time.

    h2 = jnp.dot(h1, w2_ref[...], preferred_element_type=jnp.float32)
    h2 = jnp.maximum(h2 + b2_ref[...], 0.0).astype(cdt)       # ReLU(fc2)

    out = jnp.dot(h2, w3_ref[...], preferred_element_type=jnp.float32)
    # Narrow, bias-folded store: only the real output columns hit HBM.
    o_ref[...] = (out[:, :out_dim] + b3_ref[...]).astype(o_ref.dtype)


# ---------------------------------------------------------------------------
# EmbeddingMLP wrapper (master f32 params + padded/folded kernel params)
# ---------------------------------------------------------------------------
class EmbeddingMLPPallas:
    def __init__(self, key, cat_num_classes, num_features, hidden_dim,
                 output_dim, compute_dtype=jnp.bfloat16, block_b=1024):
        self.num_features = num_features
        self.hidden_dim = hidden_dim
        self.h2_dim = hidden_dim // 2
        self.output_dim = output_dim
        self.compute_dtype = compute_dtype
        self.block_b = block_b

        self.cat_num_classes = list(cat_num_classes)
        self.emb_dims = [min(50, max(2, n // 2)) for n in cat_num_classes]
        self.d_in = num_features + sum(self.emb_dims)

        # lane/sublane-friendly padded dims used by the kernel (128, not 256)
        self.H_PAD = _round_up(hidden_dim, 128)
        self.H2_PAD = _round_up(self.h2_dim, 128)
        self.OUT_PAD = _round_up(output_dim, 128)
        self.NC_PAD = [_round_up(n, 8) for n in cat_num_classes]
        self.NC_TOTAL = sum(self.NC_PAD)
        offs, acc = [], 0
        for p in self.NC_PAD:
            offs.append(acc)
            acc += p
        self.offsets = tuple(offs)

        keys = jax.random.split(key, len(cat_num_classes) + 6)

        def xavier(k, shape):
            fan_in, fan_out = shape
            limit = (6.0 / (fan_in + fan_out)) ** 0.5
            return jax.random.uniform(k, shape, jnp.float32, -limit, limit)

        def bias(k, fan_in, n):
            bound = 1.0 / (fan_in ** 0.5)
            return jax.random.uniform(k, (n,), jnp.float32, -bound, bound)

        # master float32 parameters (used by the pure-JAX reference)
        self.emb_tables = [xavier(keys[i], (n, d)) for i, (n, d)
                           in enumerate(zip(cat_num_classes, self.emb_dims))]
        self.w1 = xavier(keys[-6], (self.d_in, hidden_dim))
        self.b1 = bias(keys[-5], self.d_in, hidden_dim)
        self.w2 = xavier(keys[-4], (hidden_dim, self.h2_dim))
        self.b2 = bias(keys[-3], hidden_dim, self.h2_dim)
        self.w3 = xavier(keys[-2], (self.h2_dim, output_dim))
        self.b3 = bias(keys[-1], self.h2_dim, output_dim)

        self._kernel_params = {}

    # one-time prep: fold E_i @ W1_i (+ b1) into one table, pad, cast dtype
    def _prep(self, cdt):
        kname = jnp.dtype(cdt).name
        if kname in self._kernel_params:
            return self._kernel_params[kname]

        def pad2(a, rows, cols):
            out = jnp.zeros((rows, cols), jnp.float32)
            return out.at[:a.shape[0], :a.shape[1]].set(a)

        # Row-concatenated folded categorical tables; b1 folded into table 0
        # (exact in f32 since each one-hot row sums to exactly 1 per column).
        t_all = jnp.zeros((self.NC_TOTAL, self.H_PAD), jnp.float32)
        off_in = self.num_features
        for i, (tbl, d) in enumerate(zip(self.emb_tables, self.emb_dims)):
            t = tbl @ self.w1[off_in:off_in + d]              # (nc_i, hidden)
            if i == 0:
                t = t + self.b1[None, :]
            t_all = t_all.at[self.offsets[i]:self.offsets[i] + t.shape[0],
                             :t.shape[1]].set(t)
            off_in += d

        params = (
            t_all.astype(cdt),                                         # tcat
            pad2(self.w1[:self.num_features], self.num_features,
                 self.H_PAD).astype(cdt),                              # w1n
            pad2(self.w2, self.H_PAD, self.H2_PAD).astype(cdt),        # w2
            pad2(self.b2[None, :], 1, self.H2_PAD),                    # b2 f32
            pad2(self.w3, self.H2_PAD, self.OUT_PAD).astype(cdt),      # w3
            self.b3[None, :],                                          # b3 f32
        )
        self._kernel_params[kname] = params
        return params

    def _pick_block(self, B, cdt, block_b):
        # bf16 packs two rows per sublane -> 16-row multiples; f32 -> 8.
        mult = 16 if jnp.dtype(cdt) == jnp.dtype(jnp.bfloat16) else 8
        bb = _round_up(min(block_b, B), mult)
        # v7x megacore: split a large single-block batch into two "parallel"
        # blocks so both TensorCores get work (harmless on v5e/v6e).
        if pl.cdiv(B, bb) == 1 and B >= 1024:
            bb = _round_up(pl.cdiv(B, 2), mult)
        return bb

    def __call__(self, numeric_x, cat_x, compute_dtype=None, block_b=None):
        cdt = self.compute_dtype if compute_dtype is None else compute_dtype
        B = numeric_x.shape[0]
        bb = self._pick_block(B, cdt,
                              self.block_b if block_b is None else block_b)
        grid = (pl.cdiv(B, bb),)

        params = self._prep(cdt)

        def row_spec(shape):                          # batch-tiled inputs
            return pl.BlockSpec((bb, shape[1]), lambda i: (i, 0))

        def resident(shape):                          # VMEM-resident weights
            return pl.BlockSpec(shape, lambda i: (0, 0))

        in_specs = ([row_spec(numeric_x.shape), row_spec(cat_x.shape)]
                    + [resident(p.shape) for p in params])
        # Narrow output block: last dim equals the full array dim -> legal,
        # contiguous HBM writeback of only the real output columns.
        out_spec = pl.BlockSpec((bb, self.output_dim), lambda i: (i, 0))

        kernel = functools.partial(
            _mlp_kernel, offsets=self.offsets, nc_total=self.NC_TOTAL,
            out_dim=self.output_dim, compute_dtype=cdt)

        flops = 2 * B * (self.num_features * self.H_PAD
                         + self.NC_TOTAL * self.H_PAD
                         + self.H_PAD * self.H2_PAD
                         + self.H2_PAD * self.OUT_PAD)
        bytes_accessed = (numeric_x.size * 4 + cat_x.size * 4
                          + B * self.output_dim * 4
                          + sum(int(p.size) * p.dtype.itemsize for p in params))

        return pl.pallas_call(
            kernel,
            out_shape=jax.ShapeDtypeStruct((B, self.output_dim), jnp.float32),
            grid=grid,
            in_specs=in_specs,
            out_specs=out_spec,
            compiler_params=pltpu.CompilerParams(
                dimension_semantics=("parallel",)),
            cost_estimate=pl.CostEstimate(
                flops=flops, transcendentals=0, bytes_accessed=bytes_accessed),
        )(numeric_x, cat_x, *params)


def reference_forward(model, numeric_x, cat_x):
    """Pure-JAX reference of the PyTorch forward (eval mode)."""
    emb_outs = [tbl[cat_x[:, i]] for i, tbl in enumerate(model.emb_tables)]
    x = jnp.concatenate([numeric_x] + emb_outs, axis=1)
    x = jnp.maximum(x @ model.w1 + model.b1, 0.0)
    x = jnp.maximum(x @ model.w2 + model.b2, 0.0)
    return x @ model.w3 + model.b3


if __name__ == "__main__":
    key = jax.random.PRNGKey(0)
    k_param, k_num, k_cat, k_num2, k_cat2 = jax.random.split(key, 5)

    num_features = 4                 # ['age','billing_amount','cost_per_day','cost_age_ratio']
    cat_num_classes = [6, 10, 4]     # -> emb dims [3, 5, 2], d_in = 14
    hidden_dim = 32
    output_dim = 3

    model = EmbeddingMLPPallas(k_param, cat_num_classes, num_features,
                               hidden_dim, output_dim)

    def make_inputs(kn, kc, batch):
        numeric = jax.random.normal(kn, (batch, num_features), jnp.float32)
        cats = jnp.stack(
            [jax.random.randint(jax.random.fold_in(kc, i), (batch,), 0, n)
             for i, n in enumerate(cat_num_classes)], axis=1).astype(jnp.int32)
        return numeric, cats

    # 1) small batch, float32 compute: strict check against the JAX reference
    numeric_x, cat_x = make_inputs(k_num, k_cat, 8)
    out_f32 = jax.block_until_ready(
        model(numeric_x, cat_x, compute_dtype=jnp.float32))
    ref = reference_forward(model, numeric_x, cat_x)
    assert out_f32.shape == (8, output_dim)
    assert jnp.allclose(out_f32, ref, atol=1e-4, rtol=1e-4)

    # 2) larger batch, bf16 compute, 2-block "parallel" batch grid (megacore)
    numeric_b, cat_b = make_inputs(k_num2, k_cat2, 1024)
    out_bf16 = jax.block_until_ready(
        model(numeric_b, cat_b, compute_dtype=jnp.bfloat16))
    ref_b = reference_forward(model, numeric_b, cat_b)
    assert out_bf16.shape == (1024, output_dim)
    assert jnp.allclose(out_bf16, ref_b, atol=1e-1, rtol=5e-2)

    print("KERNEL_OK")
</pallas_src>

<mosaic_0001>
module attributes {stable_mosaic.version = 11 : i64} {
  func.func @_mlp_kernel(%arg0: i32, %arg1: memref<8x4xf32, #tpu.memory_space<vmem>>, %arg2: memref<8x3xi32, #tpu.memory_space<vmem>>, %arg3: memref<32x128xf32, #tpu.memory_space<vmem>>, %arg4: memref<4x128xf32, #tpu.memory_space<vmem>>, %arg5: memref<128x128xf32, #tpu.memory_space<vmem>>, %arg6: memref<1x128xf32, #tpu.memory_space<vmem>>, %arg7: memref<128x128xf32, #tpu.memory_space<vmem>>, %arg8: memref<1x3xf32, #tpu.memory_space<vmem>>, %arg9: memref<8x3xf32, #tpu.memory_space<vmem>>) attributes {dimension_semantics = [#tpu.dimension_semantics<parallel>], iteration_bounds = array<i64: 1>, scalar_prefetch = 0 : i64, scratch_operands = 0 : i64, tpu.core_type = #tpu.core_type<tc>, window_params = [{transform_indices = @transform_0, window_bounds = array<i64: 8, 4>}, {transform_indices = @transform_1, window_bounds = array<i64: 8, 3>}, {pipeline_mode = #tpu.pipeline_mode<synchronous>, transform_indices = @transform_2, window_bounds = array<i64: 32, 128>}, {pipeline_mode = #tpu.pipeline_mode<synchronous>, transform_indices = @transform_3, window_bounds = array<i64: 4, 128>}, {pipeline_mode = #tpu.pipeline_mode<synchronous>, transform_indices = @transform_4, window_bounds = array<i64: 128, 128>}, {pipeline_mode = #tpu.pipeline_mode<synchronous>, transform_indices = @transform_5, window_bounds = array<i64: 1, 128>}, {pipeline_mode = #tpu.pipeline_mode<synchronous>, transform_indices = @transform_6, window_bounds = array<i64: 128, 128>}, {pipeline_mode = #tpu.pipeline_mode<synchronous>, transform_indices = @transform_7, window_bounds = array<i64: 1, 3>}, {transform_indices = @transform_8, window_bounds = array<i64: 8, 3>}]} {
    %c0 = arith.constant 0 : index
    %c0_0 = arith.constant 0 : index
    %0 = vector.load %arg2[%c0, %c0_0] : memref<8x3xi32, #tpu.memory_space<vmem>>, vector<8x3xi32>
    %1 = tpu.iota {dimensions = array<i32: 1>} : vector<8x32xi32>
    %2 = vector.extract_strided_slice %0 {offsets = [0, 0], sizes = [8, 1], strides = [1, 1]} : vector<8x3xi32> to vector<8x1xi32>
    %c0_i32 = arith.constant 0 : i32
    %3 = vector.broadcast %c0_i32 : i32 to vector<8x1xi32>
    %4 = arith.addi %2, %3 : vector<8x1xi32>
    %5 = vector.broadcast %4 : vector<8x1xi32> to vector<8x32xi32>
    %6 = arith.cmpi eq, %5, %1 : vector<8x32xi32>
    %7 = vector.extract_strided_slice %0 {offsets = [0, 1], sizes = [8, 1], strides = [1, 1]} : vector<8x3xi32> to vector<8x1xi32>
    %c8_i32 = arith.constant 8 : i32
    %8 = vector.broadcast %c8_i32 : i32 to vector<8x1xi32>
    %9 = arith.addi %7, %8 : vector<8x1xi32>
    %10 = vector.broadcast %9 : vector<8x1xi32> to vector<8x32xi32>
    %11 = arith.cmpi eq, %10, %1 : vector<8x32xi32>
    %12 = arith.ori %6, %11 : vector<8x32xi1>
    %13 = vector.extract_strided_slice %0 {offsets = [0, 2], sizes = [8, 1], strides = [1, 1]} : vector<8x3xi32> to vector<8x1xi32>
    %c24_i32 = arith.constant 24 : i32
    %14 = vector.broadcast %c24_i32 : i32 to vector<8x1xi32>
    %15 = arith.addi %13, %14 : vector<8x1xi32>
    %16 = vector.broadcast %15 : vector<8x1xi32> to vector<8x32xi32>
    %17 = arith.cmpi eq, %16, %1 : vector<8x32xi32>
    %18 = arith.ori %12, %17 : vector<8x32xi1>
    %19 = arith.extui %18 : vector<8x32xi1> to vector<8x32xi32>
    %20 = arith.sitofp %19 : vector<8x32xi32> to vector<8x32xf32>
    %c0_1 = arith.constant 0 : index
    %c0_2 = arith.constant 0 : index
    %21 = vector.load %arg1[%c0_1, %c0_2] : memref<8x4xf32, #tpu.memory_space<vmem>>, vector<8x4xf32>
    %c0_3 = arith.constant 0 : index
    %c0_4 = arith.constant 0 : index
    %22 = vector.load %arg4[%c0_3, %c0_4] : memref<4x128xf32, #tpu.memory_space<vmem>>, vector<4x128xf32>
    %cst = arith.constant dense<0.000000e+00> : vector<8x128xf32>
    %23 = tpu.matmul %21, %22, %cst {dimension_numbers = #tpu.dot_dimension_numbers<[1], [0], [0], [1], [0, 0, 1, 1], [], []>} : vector<8x4xf32>, vector<4x128xf32>, vector<8x128xf32> -> vector<8x128xf32>
    %c0_5 = arith.constant 0 : index
    %c0_6 = arith.constant 0 : index
    %24 = vector.load %arg3[%c0_5, %c0_6] : memref<32x128xf32, #tpu.memory_space<vmem>>, vector<32x128xf32>
    %cst_7 = arith.constant dense<0.000000e+00> : vector<8x128xf32>
    %25 = tpu.matmul %20, %24, %cst_7 {dimension_numbers = #tpu.dot_dimension_numbers<[1], [0], [0], [1], [0, 0, 1, 1], [], []>} : vector<8x32xf32>, vector<32x128xf32>, vector<8x128xf32> -> vector<8x128xf32>
    %26 = arith.addf %23, %25 : vector<8x128xf32>
    %cst_8 = arith.constant 0.000000e+00 : f32
    %27 = vector.broadcast %cst_8 : f32 to vector<8x128xf32>
    %28 = arith.maximumf %26, %27 : vector<8x128xf32>
    %c0_9 = arith.constant 0 : index
    %c0_10 = arith.constant 0 : index
    %29 = vector.load %arg5[%c0_9, %c0_10] : memref<128x128xf32, #tpu.memory_space<vmem>>, vector<128x128xf32>
    %cst_11 = arith.constant dense<0.000000e+00> : vector<8x128xf32>
    %30 = tpu.matmul %28, %29, %cst_11 {dimension_numbers = #tpu.dot_dimension_numbers<[1], [0], [0], [1], [0, 0, 1, 1], [], []>} : vector<8x128xf32>, vector<128x128xf32>, vector<8x128xf32> -> vector<8x128xf32>
    %c0_12 = arith.constant 0 : index
    %c0_13 = arith.constant 0 : index
    %31 = vector.load %arg6[%c0_12, %c0_13] : memref<1x128xf32, #tpu.memory_space<vmem>>, vector<1x128xf32>
    %32 = vector.broadcast %31 : vector<1x128xf32> to vector<8x128xf32>
    %33 = arith.addf %30, %32 : vector<8x128xf32>
    %cst_14 = arith.constant 0.000000e+00 : f32
    %34 = vector.broadcast %cst_14 : f32 to vector<8x128xf32>
    %35 = arith.maximumf %33, %34 : vector<8x128xf32>
    %c0_15 = arith.constant 0 : index
    %c0_16 = arith.constant 0 : index
    %36 = vector.load %arg7[%c0_15, %c0_16] : memref<128x128xf32, #tpu.memory_space<vmem>>, vector<128x128xf32>
    %cst_17 = arith.constant dense<0.000000e+00> : vector<8x128xf32>
    %37 = tpu.matmul %35, %36, %cst_17 {dimension_numbers = #tpu.dot_dimension_numbers<[1], [0], [0], [1], [0, 0, 1, 1], [], []>} : vector<8x128xf32>, vector<128x128xf32>, vector<8x128xf32> -> vector<8x128xf32>
    %38 = vector.extract_strided_slice %37 {offsets = [0, 0], sizes = [8, 3], strides = [1, 1]} : vector<8x128xf32> to vector<8x3xf32>
    %c0_18 = arith.constant 0 : index
    %c0_19 = arith.constant 0 : index
    %39 = vector.load %arg8[%c0_18, %c0_19] : memref<1x3xf32, #tpu.memory_space<vmem>>, vector<1x3xf32>
    %40 = vector.broadcast %39 : vector<1x3xf32> to vector<8x3xf32>
    %41 = arith.addf %38, %40 : vector<8x3xf32>
    %c0_20 = arith.constant 0 : index
    %c0_21 = arith.constant 0 : index
    %42 = vector.load %arg9[%c0_20, %c0_21] : memref<8x3xf32, #tpu.memory_space<vmem>>, vector<8x3xf32>
    tpu.vector_store %arg9[%c0_20, %c0_21], %41 {strides = array<i32>} : memref<8x3xf32, #tpu.memory_space<vmem>>, vector<8x3xf32>,
    return
  }
  func.func @transform_0(%arg0: i32) -> (i32, i32) {
    %c0_i32 = arith.constant 0 : i32
    %c0_i32_0 = arith.constant 0 : i32
    return %arg0, %c0_i32 : i32, i32
  }
  func.func @transform_1(%arg0: i32) -> (i32, i32) {
    %c0_i32 = arith.constant 0 : i32
    %c0_i32_0 = arith.constant 0 : i32
    return %arg0, %c0_i32 : i32, i32
  }
  func.func @transform_2(%arg0: i32) -> (i32, i32) {
    %c0_i32 = arith.constant 0 : i32
    %c0_i32_0 = arith.constant 0 : i32
    %c0_i32_1 = arith.constant 0 : i32
    return %c0_i32, %c0_i32_0 : i32, i32
  }
  func.func @transform_3(%arg0: i32) -> (i32, i32) {
    %c0_i32 = arith.constant 0 : i32
    %c0_i32_0 = arith.constant 0 : i32
    %c0_i32_1 = arith.constant 0 : i32
    return %c0_i32, %c0_i32_0 : i32, i32
  }
  func.func @transform_4(%arg0: i32) -> (i32, i32) {
    %c0_i32 = arith.constant 0 : i32
    %c0_i32_0 = arith.constant 0 : i32
    %c0_i32_1 = arith.constant 0 : i32
    return %c0_i32, %c0_i32_0 : i32, i32
  }
  func.func @transform_5(%arg0: i32) -> (i32, i32) {
    %c0_i32 = arith.constant 0 : i32
    %c0_i32_0 = arith.constant 0 : i32
    %c0_i32_1 = arith.constant 0 : i32
    return %c0_i32, %c0_i32_0 : i32, i32
  }
  func.func @transform_6(%arg0: i32) -> (i32, i32) {
    %c0_i32 = arith.constant 0 : i32
    %c0_i32_0 = arith.constant 0 : i32
    %c0_i32_1 = arith.constant 0 : i32
    return %c0_i32, %c0_i32_0 : i32, i32
  }
  func.func @transform_7(%arg0: i32) -> (i32, i32) {
    %c0_i32 = arith.constant 0 : i32
    %c0_i32_0 = arith.constant 0 : i32
    %c0_i32_1 = arith.constant 0 : i32
    return %c0_i32, %c0_i32_0 : i32, i32
  }
  func.func @transform_8(%arg0: i32) -> (i32, i32) {
    %c0_i32 = arith.constant 0 : i32
    %c0_i32_0 = arith.constant 0 : i32
    return %arg0, %c0_i32 : i32, i32
  }
}

</mosaic_0001>

<llo_original>
// kernel: tpu_custom_call.1
$region0: #{tpu_custom_call.1}
  #allocation0 [shape = 'u32[]', space=smem, size = 0x4, offset = 0x4, fixed_abs, tag = 'smem constant byte address 0x4 - core index']
  #allocation1 [shape = 'u32[144,128]{1,0:T(1,128)}', space=vmem, size = 0x12000, scoped, tag = 'internal scratch']
  %s0 = inlined_call_operand.vmem [shape: f32[8,4], index: 0, kind: input, shape index: {}]
  %s1 = inlined_call_operand.vmem [shape: s32[8,3], index: 1, kind: input, shape index: {}]
  %s2 = inlined_call_operand.hbm [shape: f32[32,128], index: 2, kind: input, shape index: {}]
  %s3 = inlined_call_operand.vmem [shape: f32[4,128], index: 3, kind: input, shape index: {}]
  %s4 = inlined_call_operand.hbm [shape: f32[128,128], index: 4, kind: input, shape index: {}]
  %s5 = inlined_call_operand.vmem [shape: f32[1,128], index: 5, kind: input, shape index: {}]
  %s6 = inlined_call_operand.hbm [shape: f32[128,128], index: 6, kind: input, shape index: {}]
  %s7 = inlined_call_operand.vmem [shape: f32[1,3], index: 7, kind: input, shape index: {}]
  %s8 = inlined_call_operand.vmem [shape: f32[8,3], index: 8, kind: output, shape index: {}]
  %s9 = sld [smem:[#allocation0]]
  $region54: #{tpu_custom_call.1} parent=0
    _
  %s11 = ssub.s32 1, %s9
  %s12 = scalar_select 0, %s11, %s9
  $region1: #{tpu_custom_call.1} parent=0
    #allocation2 [shape = 'u8[16384]{0}', space=vmem, size = 0x4000, scoped, tag = 'input window, operand 2, single buffered']
    #allocation3 [shape = 's32[1]{0}', space=sflag, size = 0x4, scoped, tag = 'scoped memory for tpu_custom_call.1']
    #allocation4 [shape = 'u8[65536]{0}', space=vmem, size = 0x10000, scoped, tag = 'input window, operand 4, single buffered']
    #allocation5 [shape = 's32[1]{0}', space=sflag, size = 0x4, scoped, tag = 'scoped memory for tpu_custom_call.1']
    #allocation6 [shape = 'u8[65536]{0}', space=vmem, size = 0x10000, scoped, tag = 'input window, operand 6, single buffered']
    %13 = vsyncpa [#allocation3], 0
    %14 = vsyncpa [#allocation5], 0
    // Predicated region
    $region2: #{tpu_custom_call.1} parent=1 // pred_check
      _
    $region3: #{tpu_custom_call.1} parent=1 // pred_check_branch
      %16 = sbr.rel (0) target = $region5
    $region4: #{tpu_custom_call.1} parent=1 // pred_region
      _
    $region5: #{tpu_custom_call.1} parent=1 // pred_fallthru
      _
    // Predicated region
    $region6: #{tpu_custom_call.1} parent=1 // pred_check
      _
    $region7: #{tpu_custom_call.1} parent=1 // pred_check_branch
      %18 = sbr.rel (0) target = $region9
    $region8: #{tpu_custom_call.1} parent=1 // pred_region
      _
    $region9: #{tpu_custom_call.1} parent=1 // pred_fallthru
      _
    // Predicated region
    $region10: #{tpu_custom_call.1} parent=1 // pred_check
      _
    $region11: #{tpu_custom_call.1} parent=1 // pred_check_branch
      %20 = sbr.rel (0) target = $region13
    $region12: #{tpu_custom_call.1} parent=1 // pred_region
      %s22 = ssub.s32 512, 512
      %23 = vsyncadd [#allocation3], %s22
      %s24 = sshll.u32 [#allocation2], 4
      %s25 = int_to_ptr.vmem [resolvable:$true] %s24
      %30 = dma.hbm_to_vmem [thread:$0]  %s2, 512, %s25, [#allocation3], 128, 128, 8
    $region13: #{tpu_custom_call.1} parent=1 // pred_fallthru
      _
    // Predicated region
    $region14: #{tpu_custom_call.1} parent=1 // pred_check
      _
    $region15: #{tpu_custom_call.1} parent=1 // pred_check_branch
      %32 = sbr.rel (0) target = $region17
    $region16: #{tpu_custom_call.1} parent=1 // pred_region
      _
    $region17: #{tpu_custom_call.1} parent=1 // pred_fallthru
      _
    // Predicated region
    $region18: #{tpu_custom_call.1} parent=1 // pred_check
      _
    $region19: #{tpu_custom_call.1} parent=1 // pred_check_branch
      %34 = sbr.rel (0) target = $region21
    $region20: #{tpu_custom_call.1} parent=1 // pred_region
      %s36 = ssub.s32 2048, 2048
      %37 = vsyncadd [#allocation5], %s36
      %s38 = sshll.u32 [#allocation4], 4
      %s39 = int_to_ptr.vmem [resolvable:$true] %s38
      %44 = dma.hbm_to_vmem [thread:$0]  %s4, 2048, %s39, [#allocation5], 128, 128, 8
    $region21: #{tpu_custom_call.1} parent=1 // pred_fallthru
      _
    // Predicated region
    $region22: #{tpu_custom_call.1} parent=1 // pred_check
      _
    $region23: #{tpu_custom_call.1} parent=1 // pred_check_branch
      %46 = sbr.rel (0) target = $region25
    $region24: #{tpu_custom_call.1} parent=1 // pred_region
      _
    $region25: #{tpu_custom_call.1} parent=1 // pred_fallthru
      _
    // Predicated region
    $region26: #{tpu_custom_call.1} parent=1 // pred_check
      _
    $region27: #{tpu_custom_call.1} parent=1 // pred_check_branch
      %48 = sbr.rel (0) target = $region29
    $region28: #{tpu_custom_call.1} parent=1 // pred_region
      %s50 = ssub.s32 2048, 2048
      %51 = vsyncadd [#allocation5], %s50
      %s52 = sshll.u32 [#allocation6], 4
      %s53 = int_to_ptr.vmem [resolvable:$true] %s52
      %58 = dma.hbm_to_vmem [thread:$0]  %s6, 2048, %s53, [#allocation5], 128, 128, 8
    $region29: #{tpu_custom_call.1} parent=1 // pred_fallthru
      _
    // Predicated region
    $region30: #{tpu_custom_call.1} parent=1 // pred_check
      _
    $region31: #{tpu_custom_call.1} parent=1 // pred_check_branch
      %60 = sbr.rel (0) target = $region33
    $region32: #{tpu_custom_call.1} parent=1 // pred_region
      _
    $region33: #{tpu_custom_call.1} parent=1 // pred_fallthru
      _
    // Predicated region
    $region34: #{tpu_custom_call.1} parent=1 // pred_check
      _
    $region35: #{tpu_custom_call.1} parent=1 // pred_check_branch
      %62 = sbr.rel (0) target = $region37
    $region36: #{tpu_custom_call.1} parent=1 // pred_region
      %63 = dma.done [#allocation3], 512
    $region37: #{tpu_custom_call.1} parent=1 // pred_fallthru
      _
    // Predicated region
    $region38: #{tpu_custom_call.1} parent=1 // pred_check
      _
    $region39: #{tpu_custom_call.1} parent=1 // pred_check_branch
      %65 = sbr.rel (0) target = $region41
    $region40: #{tpu_custom_call.1} parent=1 // pred_region
      %66 = dma.done [#allocation5], 2048
    $region41: #{tpu_custom_call.1} parent=1 // pred_fallthru
      _
    // Predicated region
    $region42: #{tpu_custom_call.1} parent=1 // pred_check
      _
    $region43: #{tpu_custom_call.1} parent=1 // pred_check_branch
      %68 = sbr.rel (0) target = $region45
    $region44: #{tpu_custom_call.1} parent=1 // pred_region
      %69 = dma.done [#allocation5], 2048
    $region45: #{tpu_custom_call.1} parent=1 // pred_fallthru
      _
    %v70 = vld [vmem:[%s1] sm:$0xff]
    %v71 = vlaneseq
    %v72 = vand.u32 %v71, 127
    %73 = vset.pattern.permute.xlu0 0
    %74 = vperm.xlu0 %73, %v70
    %v75 = vpop.permute.xlu0 %74
    %vm76 = vcmp.eq.s32.totalorder %v75, %v72
    %v77 = vadd.s32 %v70, 8
    %78 = vset.pattern.permute.xlu0 1
    %79 = vperm.xlu0 %78, %v77
    %v80 = vpop.permute.xlu0 %79
    %vm81 = vcmp.eq.s32.totalorder %v80, %v72
    %vm82 = vmor %vm76, %vm81
    %v83 = vadd.s32 %v70, 24
    %84 = vset.pattern.permute.xlu0 2
    %85 = vperm.xlu0 %84, %v83
    %v86 = vpop.permute.xlu0 %85
    %vm87 = vcmp.eq.s32.totalorder %v86, %v72
    %vm88 = vmor %vm82, %vm87
    %v89 = vsel %vm88, 1, 0
    %v90 = vcvt.s32.f32 %v89
    %v91 = vld [vmem:[%s0] sm:$0xff]
    %v92 = vld [vmem:[%s3] sm:$0xf]
    %v93 = vld [vmem:[#allocation2] sm:$0xff]
    %v94 = vld [vmem:[#allocation2 + $0x8] sm:$0xff]
    %v95 = vld [vmem:[#allocation2 + $0x10] sm:$0xff]
    %v96 = vld [vmem:[#allocation2 + $0x18] sm:$0xff]
    %vm97 = vcmask 261120
    %v99 = vsel %vm97, %v90, 0
    %101 = vmatprep.subr.mxu0 0.0
    %102 = vmatpush1.msra.mxu0 %v93
    %103 = vmatprep.subr.mxu0 0.0
    %104 = vmatpush1.msra.mxu0 %v94
    %105 = vmatprep.subr.mxu0 0.0
    %106 = vmatpush1.msra.mxu0 %v95
    %107 = vmatprep.subr.mxu0 0.0
    %108 = vmatpush1.msra.mxu0 %v96
    %109 = vmatprep.subr.mxu0 0.0
    %110 = vmatpush1.msra.mxu0 0.0
    %111 = vmatprep.subr.mxu0 0.0
    %112 = vmatpush1.msra.mxu0 0.0
    %113 = vmatprep.subr.mxu0 0.0
    %114 = vmatpush1.msra.mxu0 0.0
    %115 = vmatprep.subr.mxu0 0.0
    %116 = vmatpush1.msra.mxu0 0.0
    %117 = vmatprep.subr.mxu0 0.0
    %118 = vmatpush1.msra.mxu0 0.0
    %119 = vmatprep.subr.mxu0 0.0
    %120 = vmatpush1.msra.mxu0 0.0
    %121 = vmatprep.subr.mxu0 0.0
    %122 = vmatpush1.msra.mxu0 0.0
    %123 = vmatprep.subr.mxu0 0.0
    %124 = vmatpush1.msra.mxu0 0.0
    %125 = vmatprep.subr.mxu0 0.0
    %126 = vmatpush1.msra.mxu0 0.0
    %127 = vmatprep.subr.mxu0 0.0
    %128 = vmatpush1.msra.mxu0 0.0
    %129 = vmatprep.subr.mxu0 0.0
    %130 = vmatpush1.msra.mxu0 0.0
    %131 = vmatprep.subr.mxu0 0.0
    %132 = vmatpush1.msra.mxu0 0.0
    %133 = vmatprep.subr.mxu0 0.0
    %134 = vmatpush1.msra.mxu0 0.0
    %135 = vmatprep.subr.mxu0 0.0
    %136 = vmatpush1.msra.mxu0 0.0
    %137 = vmatprep.subr.mxu0 0.0
    %138 = vmatpush1.msra.mxu0 0.0
    %139 = vmatprep.subr.mxu0 0.0
    %140 = vmatpush1.msra.mxu0 0.0
    %141 = vmatprep.subr.mxu0 0.0
    %142 = vmatpush1.msra.mxu0 0.0
    %143 = vmatprep.subr.mxu0 0.0
    %144 = vmatpush1.msra.mxu0 0.0
    %145 = vmatprep.subr.mxu0 0.0
    %146 = vmatpush1.msra.mxu0 0.0
    %147 = vmatprep.subr.mxu0 0.0
    %148 = vmatpush1.msra.mxu0 0.0
    %149 = vmatprep.subr.mxu0 0.0
    %150 = vmatpush1.msra.mxu0 0.0
    %151 = vmatprep.subr.mxu0 0.0
    %152 = vmatpush1.msra.mxu0 0.0
    %153 = vmatprep.subr.mxu0 0.0
    %154 = vmatpush1.msra.mxu0 0.0
    %155 = vmatprep.subr.mxu0 0.0
    %156 = vmatpush1.msra.mxu0 0.0
    %157 = vmatprep.subr.mxu0 0.0
    %158 = vmatpush1.msra.mxu0 0.0
    %159 = vmatprep.subr.mxu0 0.0
    %160 = vmatpush1.msra.mxu0 0.0
    %161 = vmatprep.subr.mxu0 0.0
    %162 = vmatpush1.msra.mxu0 0.0
    %163 = vmatprep.subr.mxu0 0.0
    %164 = vmatpush1.msra.mxu0 0.0
    %165 = vmatprep.mubr.f32.mxu0 0.0
    %166 = vmatmul.mubr.f32.gmra.mrb[0].mxu0 %v99
    %v167 = vpop.f32.mrb[0].mxu0
    %v168 = vadd.f32 0.0, %v167
    %v169 = vpop.f32.mrb[0].mxu0
    %170 = vdwg.mxu0
    %vm171 = vcmask 31744
    %v173 = vsel %vm171, %v91, 0
    %vm175 = vcmask 1043456
    %v177 = vsel %vm175, %v92, 0
    %179 = vmatprep.subr.mxu0 0.0
    %180 = vmatpush1.msra.mxu0 %v177
    %181 = vmatprep.subr.mxu0 0.0
    %182 = vmatpush1.msra.mxu0 0.0
    %183 = vmatprep.subr.mxu0 0.0
    %184 = vmatpush1.msra.mxu0 0.0
    %185 = vmatprep.subr.mxu0 0.0
    %186 = vmatpush1.msra.mxu0 0.0
    %187 = vmatprep.subr.mxu0 0.0
    %188 = vmatpush1.msra.mxu0 0.0
    %189 = vmatprep.subr.mxu0 0.0
    %190 = vmatpush1.msra.mxu0 0.0
    %191 = vmatprep.subr.mxu0 0.0
    %192 = vmatpush1.msra.mxu0 0.0
    %193 = vmatprep.subr.mxu0 0.0
    %194 = vmatpush1.msra.mxu0 0.0
    %195 = vmatprep.subr.mxu0 0.0
    %196 = vmatpush1.msra.mxu0 0.0
    %197 = vmatprep.subr.mxu0 0.0
    %198 = vmatpush1.msra.mxu0 0.0
    %199 = vmatprep.subr.mxu0 0.0
    %200 = vmatpush1.msra.mxu0 0.0
    %201 = vmatprep.subr.mxu0 0.0
    %202 = vmatpush1.msra.mxu0 0.0
    %203 = vmatprep.subr.mxu0 0.0
    %204 = vmatpush1.msra.mxu0 0.0
    %205 = vmatprep.subr.mxu0 0.0
    %206 = vmatpush1.msra.mxu0 0.0
    %207 = vmatprep.subr.mxu0 0.0
    %208 = vmatpush1.msra.mxu0 0.0
    %209 = vmatprep.subr.mxu0 0.0
    %210 = vmatpush1.msra.mxu0 0.0
    %211 = vmatprep.subr.mxu0 0.0
    %212 = vmatpush1.msra.mxu0 0.0
    %213 = vmatprep.subr.mxu0 0.0
    %214 = vmatpush1.msra.mxu0 0.0
    %215 = vmatprep.subr.mxu0 0.0
    %216 = vmatpush1.msra.mxu0 0.0
    %217 = vmatprep.subr.mxu0 0.0
    %218 = vmatpush1.msra.mxu0 0.0
    %219 = vmatprep.subr.mxu0 0.0
    %220 = vmatpush1.msra.mxu0 0.0
    %221 = vmatprep.subr.mxu0 0.0
    %222 = vmatpush1.msra.mxu0 0.0
    %223 = vmatprep.subr.mxu0 0.0
    %224 = vmatpush1.msra.mxu0 0.0
    %225 = vmatprep.subr.mxu0 0.0
    %226 = vmatpush1.msra.mxu0 0.0
    %227 = vmatprep.subr.mxu0 0.0
    %228 = vmatpush1.msra.mxu0 0.0
    %229 = vmatprep.subr.mxu0 0.0
    %230 = vmatpush1.msra.mxu0 0.0
    %231 = vmatprep.subr.mxu0 0.0
    %232 = vmatpush1.msra.mxu0 0.0
    %233 = vmatprep.subr.mxu0 0.0
    %234 = vmatpush1.msra.mxu0 0.0
    %235 = vmatprep.subr.mxu0 0.0
    %236 = vmatpush1.msra.mxu0 0.0
    %237 = vmatprep.subr.mxu0 0.0
    %238 = vmatpush1.msra.mxu0 0.0
    %239 = vmatprep.subr.mxu0 0.0
    %240 = vmatpush1.msra.mxu0 0.0
    %241 = vmatprep.subr.mxu0 0.0
    %242 = vmatpush1.msra.mxu0 0.0
    %243 = vmatprep.mubr.f32.mxu0 0.0
    %244 = vmatmul.mubr.f32.gmra.mrb[0].mxu0 %v173
    %v245 = vpop.f32.mrb[0].mxu0
    %v246 = vadd.f32 %v168, %v245
    %v247 = vpop.f32.mrb[0].mxu0
    %248 = vdwg.mxu0
    %v249 = vmax.f32 %v246, 0.0
    %v250 = vld [vmem:[#allocation4] sm:$0xff]
    %v251 = vld [vmem:[#allocation4 + $0x8] sm:$0xff]
    %v252 = vld [vmem:[#allocation4 + $0x10] sm:$0xff]
    %v253 = vld [vmem:[#allocation4 + $0x18] sm:$0xff]
    %v254 = vld [vmem:[#allocation4 + $0x20] sm:$0xff]
    %v255 = vld [vmem:[#allocation4 + $0x28] sm:$0xff]
    %v256 = vld [vmem:[#allocation4 + $0x30] sm:$0xff]
    %v257 = vld [vmem:[#allocation4 + $0x38] sm:$0xff]
    %v258 = vld [vmem:[#allocation4 + $0x40] sm:$0xff]
    %v259 = vld [vmem:[#allocation4 + $0x48] sm:$0xff]
    %v260 = vld [vmem:[#allocation4 + $0x50] sm:$0xff]
    %v261 = vld [vmem:[#allocation4 + $0x58] sm:$0xff]
    %v262 = vld [vmem:[#allocation4 + $0x60] sm:$0xff]
    %v263 = vld [vmem:[#allocation4 + $0x68] sm:$0xff]
    %v264 = vld [vmem:[#allocation4 + $0x70] sm:$0xff]
    %v265 = vld [vmem:[#allocation4 + $0x78] sm:$0xff]
    %v266 = vld [vmem:[%s5] sm:$0x1]
    %v268 = vlaneseq
    %v269 = vshrl.u32 %v268, 7
    %v270 = vsub.s32 0, %v269
    %v271 = vrot.slane %v266, %v270
    %273 = vmatprep.subr.mxu0 0.0
    %274 = vmatpush1.msra.mxu0 %v250
    %275 = vmatprep.subr.mxu0 0.0
    %276 = vmatpush1.msra.mxu0 %v251
    %277 = vmatprep.subr.mxu0 0.0
    %278 = vmatpush1.msra.mxu0 %v252
    %279 = vmatprep.subr.mxu0 0.0
    %280 = vmatpush1.msra.mxu0 %v253
    %281 = vmatprep.subr.mxu0 0.0
    %282 = vmatpush1.msra.mxu0 %v254
    %283 = vmatprep.subr.mxu0 0.0
    %284 = vmatpush1.msra.mxu0 %v255
    %285 = vmatprep.subr.mxu0 0.0
    %286 = vmatpush1.msra.mxu0 %v256
    %287 = vmatprep.subr.mxu0 0.0
    %288 = vmatpush1.msra.mxu0 %v257
    %289 = vmatprep.subr.mxu0 0.0
    %290 = vmatpush1.msra.mxu0 %v258
    %291 = vmatprep.subr.mxu0 0.0
    %292 = vmatpush1.msra.mxu0 %v259
    %293 = vmatprep.subr.mxu0 0.0
    %294 = vmatpush1.msra.mxu0 %v260
    %295 = vmatprep.subr.mxu0 0.0
    %296 = vmatpush1.msra.mxu0 %v261
    %297 = vmatprep.subr.mxu0 0.0
    %298 = vmatpush1.msra.mxu0 %v262
    %299 = vmatprep.subr.mxu0 0.0
    %300 = vmatpush1.msra.mxu0 %v263
    %301 = vmatprep.subr.mxu0 0.0
    %302 = vmatpush1.msra.mxu0 %v264
    %303 = vmatprep.subr.mxu0 0.0
    %304 = vmatpush1.msra.mxu0 %v265
    %305 = vmatprep.subr.mxu0 0.0
    %306 = vmatpush1.msra.mxu0 0.0
    %307 = vmatprep.subr.mxu0 0.0
    %308 = vmatpush1.msra.mxu0 0.0
    %309 = vmatprep.subr.mxu0 0.0
    %310 = vmatpush1.msra.mxu0 0.0
    %311 = vmatprep.subr.mxu0 0.0
    %312 = vmatpush1.msra.mxu0 0.0
    %313 = vmatprep.subr.mxu0 0.0
    %314 = vmatpush1.msra.mxu0 0.0
    %315 = vmatprep.subr.mxu0 0.0
    %316 = vmatpush1.msra.mxu0 0.0
    %317 = vmatprep.subr.mxu0 0.0
    %318 = vmatpush1.msra.mxu0 0.0
    %319 = vmatprep.subr.mxu0 0.0
    %320 = vmatpush1.msra.mxu0 0.0
    %321 = vmatprep.subr.mxu0 0.0
    %322 = vmatpush1.msra.mxu0 0.0
    %323 = vmatprep.subr.mxu0 0.0
    %324 = vmatpush1.msra.mxu0 0.0
    %325 = vmatprep.subr.mxu0 0.0
    %326 = vmatpush1.msra.mxu0 0.0
    %327 = vmatprep.subr.mxu0 0.0
    %328 = vmatpush1.msra.mxu0 0.0
    %329 = vmatprep.subr.mxu0 0.0
    %330 = vmatpush1.msra.mxu0 0.0
    %331 = vmatprep.subr.mxu0 0.0
    %332 = vmatpush1.msra.mxu0 0.0
    %333 = vmatprep.subr.mxu0 0.0
    %334 = vmatpush1.msra.mxu0 0.0
    %335 = vmatprep.subr.mxu0 0.0
    %336 = vmatpush1.msra.mxu0 0.0
    %337 = vmatprep.mubr.f32.mxu0 0.0
    %338 = vmatmul.mubr.f32.gmra.mrb[0].mxu0 %v249
    %v339 = vpop.f32.mrb[0].mxu0
    %v340 = vadd.f32 %v271, %v339
    %v341 = vpop.f32.mrb[0].mxu0
    %342 = vdwg.mxu0
    %v343 = vmax.f32 %v340, 0.0
    %v344 = vld [vmem:[#allocation6] sm:$0xff]
    %v345 = vld [vmem:[#allocation6 + $0x8] sm:$0xff]
    %v346 = vld [vmem:[#allocation6 + $0x10] sm:$0xff]
    %v347 = vld [vmem:[#allocation6 + $0x18] sm:$0xff]
    %v348 = vld [vmem:[#allocation6 + $0x20] sm:$0xff]
    %v349 = vld [vmem:[#allocation6 + $0x28] sm:$0xff]
    %v350 = vld [vmem:[#allocation6 + $0x30] sm:$0xff]
    %v351 = vld [vmem:[#allocation6 + $0x38] sm:$0xff]
    %v352 = vld [vmem:[#allocation6 + $0x40] sm:$0xff]
    %v353 = vld [vmem:[#allocation6 + $0x48] sm:$0xff]
    %v354 = vld [vmem:[#allocation6 + $0x50] sm:$0xff]
    %v355 = vld [vmem:[#allocation6 + $0x58] sm:$0xff]
    %v356 = vld [vmem:[#allocation6 + $0x60] sm:$0xff]
    %v357 = vld [vmem:[#allocation6 + $0x68] sm:$0xff]
    %v358 = vld [vmem:[#allocation6 + $0x70] sm:$0xff]
    %v359 = vld [vmem:[#allocation6 + $0x78] sm:$0xff]
    %360 = vmatprep.subr.mxu0 0.0
    %361 = vmatpush1.msra.mxu0 %v344
    %362 = vmatprep.subr.mxu0 0.0
    %363 = vmatpush1.msra.mxu0 %v345
    %364 = vmatprep.subr.mxu0 0.0
    %365 = vmatpush1.msra.mxu0 %v346
    %366 = vmatprep.subr.mxu0 0.0
    %367 = vmatpush1.msra.mxu0 %v347
    %368 = vmatprep.subr.mxu0 0.0
    %369 = vmatpush1.msra.mxu0 %v348
    %370 = vmatprep.subr.mxu0 0.0
    %371 = vmatpush1.msra.mxu0 %v349
    %372 = vmatprep.subr.mxu0 0.0
    %373 = vmatpush1.msra.mxu0 %v350
    %374 = vmatprep.subr.mxu0 0.0
    %375 = vmatpush1.msra.mxu0 %v351
    %376 = vmatprep.subr.mxu0 0.0
    %377 = vmatpush1.msra.mxu0 %v352
    %378 = vmatprep.subr.mxu0 0.0
    %379 = vmatpush1.msra.mxu0 %v353
    %380 = vmatprep.subr.mxu0 0.0
    %381 = vmatpush1.msra.mxu0 %v354
    %382 = vmatprep.subr.mxu0 0.0
    %383 = vmatpush1.msra.mxu0 %v355
    %384 = vmatprep.subr.mxu0 0.0
    %385 = vmatpush1.msra.mxu0 %v356
    %386 = vmatprep.subr.mxu0 0.0
    %387 = vmatpush1.msra.mxu0 %v357
    %388 = vmatprep.subr.mxu0 0.0
    %389 = vmatpush1.msra.mxu0 %v358
    %390 = vmatprep.subr.mxu0 0.0
    %391 = vmatpush1.msra.mxu0 %v359
    %392 = vmatprep.subr.mxu0 0.0
    %393 = vmatpush1.msra.mxu0 0.0
    %394 = vmatprep.subr.mxu0 0.0
    %395 = vmatpush1.msra.mxu0 0.0
    %396 = vmatprep.subr.mxu0 0.0
    %397 = vmatpush1.msra.mxu0 0.0
    %398 = vmatprep.subr.mxu0 0.0
    %399 = vmatpush1.msra.mxu0 0.0
    %400 = vmatprep.subr.mxu0 0.0
    %401 = vmatpush1.msra.mxu0 0.0
    %402 = vmatprep.subr.mxu0 0.0
    %403 = vmatpush1.msra.mxu0 0.0
    %404 = vmatprep.subr.mxu0 0.0
    %405 = vmatpush1.msra.mxu0 0.0
    %406 = vmatprep.subr.mxu0 0.0
    %407 = vmatpush1.msra.mxu0 0.0
    %408 = vmatprep.subr.mxu0 0.0
    %409 = vmatpush1.msra.mxu0 0.0
    %410 = vmatprep.subr.mxu0 0.0
    %411 = vmatpush1.msra.mxu0 0.0
    %412 = vmatprep.subr.mxu0 0.0
    %413 = vmatpush1.msra.mxu0 0.0
    %414 = vmatprep.subr.mxu0 0.0
    %415 = vmatpush1.msra.mxu0 0.0
    %416 = vmatprep.subr.mxu0 0.0
    %417 = vmatpush1.msra.mxu0 0.0
    %418 = vmatprep.subr.mxu0 0.0
    %419 = vmatpush1.msra.mxu0 0.0
    %420 = vmatprep.subr.mxu0 0.0
    %421 = vmatpush1.msra.mxu0 0.0
    %422 = vmatprep.subr.mxu0 0.0
    %423 = vmatpush1.msra.mxu0 0.0
    %424 = vmatprep.mubr.f32.mxu0 0.0
    %425 = vmatmul.mubr.f32.gmra.mrb[0].mxu0 %v343
    %v426 = vpop.f32.mrb[0].mxu0
    %v427 = vadd.f32 0.0, %v426
    %v428 = vpop.f32.mrb[0].mxu0
    %429 = vdwg.mxu0
    %v430 = vld [vmem:[%s7] sm:$0x1]
    %v432 = vlaneseq
    %v433 = vshrl.u32 %v432, 7
    %v434 = vsub.s32 0, %v433
    %v435 = vrot.slane %v430, %v434
    %v437 = vadd.f32 %v427, %v435
    %vm438 = vcmask 23552
    %439 = vst.msk [vmem:[%s8] sm:$0xff] %vm438, %v437
    // Predicated region
    $region46: #{tpu_custom_call.1} parent=1 // pred_check
      _
    $region47: #{tpu_custom_call.1} parent=1 // pred_check_branch
      %441 = sbr.rel (0) target = $region49
    $region48: #{tpu_custom_call.1} parent=1 // pred_region
      _
    $region49: #{tpu_custom_call.1} parent=1 // pred_fallthru
      _
    // Predicated region
    $region50: #{tpu_custom_call.1} parent=1 // pred_check
      _
    $region51: #{tpu_custom_call.1} parent=1 // pred_check_branch
      %443 = sbr.rel (0) target = $region53
    $region52: #{tpu_custom_call.1} parent=1 // pred_region
      _
    $region53: #{tpu_custom_call.1} parent=1 // pred_fallthru
      _
    %444 = vsyncpa [#allocation3], 1
    %445 = vsyncpa [#allocation5], 1

</llo_original>
